<compile_context>
chip_gen: v7x
topology: tpu7x:2x2x1
jax: 0.10.0
libtpu: 0.0.40
codegen_flags: <defaults>
</compile_context>

<pallas_src>
import jax
import jax.numpy as jnp
from jax import lax
from jax.experimental import pallas as pl
from jax.experimental.pallas import tpu as pltpu


def _round_up(v, m):
    return (v + m - 1) // m * m


def _vmem_capacity_bytes():
    try:
        return int(pltpu.get_tpu_info().vmem_capacity_bytes)
    except Exception:
        return 64 * 1024 * 1024  # conservative (v7x-sized) fallback


def _lane_tile_candidates(cp):
    """Multiples of 128 that exactly divide cp, descending."""
    q = cp // 128
    return sorted({128 * d for d in range(1, q + 1) if q % d == 0}, reverse=True)


def _pick_lane_tile(cp, target):
    for c in _lane_tile_candidates(cp):
        if c <= target:
            return c
    return 128


def _next_smaller_lane_tile(cp, cur):
    smaller = [c for c in _lane_tile_candidates(cp) if c < cur]
    return smaller[0] if smaller else cur


def res_linear_kernel(x_ref, w_ref, b_ref, xres_ref, o_ref, acc_ref):
    # x_ref:    (tm, tk)  input rows, contraction slab k
    # w_ref:    (tk, tn)  pre-transposed (in, out) weight slab
    # b_ref:    (1, tn)   bias slab for output tile j
    # xres_ref: (tm, tn)  residual slice of x for output tile (i, j)
    # o_ref:    (tm, tn)  output tile
    # acc_ref:  (tm, tn)  f32 accumulator, resident across the k axis
    k = pl.program_id(2)

    @pl.when(k == 0)
    def _():
        acc_ref[...] = jnp.zeros_like(acc_ref)

    acc_ref[...] += jnp.dot(x_ref[...], w_ref[...],
                            preferred_element_type=jnp.float32)

    @pl.when(k == pl.num_programs(2) - 1)
    def _():
        o_ref[...] = (acc_ref[...] + b_ref[...]
                      + xres_ref[...].astype(jnp.float32)).astype(o_ref.dtype)


def res_linear(x, weight, bias, *, target_tm=None, target_tn=512, target_tk=1024,
               mxu_dtype=None):
    """ResLinear forward: linear(x) + x.

    x:      (..., C) float32
    weight: (C, C)   PyTorch nn.Linear layout (out_features, in_features)
    bias:   (C,)
    mxu_dtype: optional (e.g. jnp.bfloat16) — cast x/weight for the MXU, f32 accumulate.
    """
    orig_shape = x.shape
    C = orig_shape[-1]
    assert weight.shape == (C, C), "ResLinear residual requires in_chs == out_chs"
    assert bias.shape == (C,)

    x2 = x.reshape(-1, C)
    M = x2.shape[0]

    # ---- generation-aware VMEM budget ------------------------------------------------
    vmem_cap = _vmem_capacity_bytes()
    big_vmem = vmem_cap >= 100 * 1024 * 1024          # v5e / v6e: 128 MiB physical
    if big_vmem:
        vmem_budget = 96 * 1024 * 1024
        vmem_limit = 110 * 1024 * 1024
    else:                                             # v7x: 64 MiB physical per TC
        vmem_budget = 40 * 1024 * 1024
        vmem_limit = 52 * 1024 * 1024
    if target_tm is None:
        target_tm = 1024 if big_vmem else 512

    # ---- pad feature dim to lane-dense multiple of 128; pre-transpose weight ---------
    Cp = _round_up(C, 128)
    wT = weight.T                                     # (in, out): plain (k, n) MXU layout
    if Cp != C:
        pad = Cp - C
        x2 = jnp.pad(x2, ((0, 0), (0, pad)))
        wT = jnp.pad(wT, ((0, pad), (0, pad)))
        bias = jnp.pad(bias, ((0, pad),))
    b2 = bias.reshape(1, Cp)

    if mxu_dtype is not None:
        x_mxu = x2.astype(mxu_dtype)
        wT = wT.astype(mxu_dtype)
    else:
        x_mxu = x2
    mxu_itemsize = jnp.dtype(x_mxu.dtype).itemsize
    out_itemsize = jnp.dtype(x.dtype).itemsize

    # ---- tile selection: aligned, Cp-dividing, fits the per-generation budget --------
    tn = _pick_lane_tile(Cp, target_tn)
    tk = _pick_lane_tile(Cp, target_tk)
    tm = M if M <= target_tm else (target_tm // 8) * 8    # trailing partial block is OK

    def working_set(tm_, tn_, tk_):
        dbl = 2  # BlockSpec double-buffering
        return (dbl * (tm_ * tk_ + tk_ * tn_) * mxu_itemsize        # x slab, wT slab
                + dbl * (tm_ * tn_ * 4 + tn_ * 4)                   # residual + bias (f32)
                + dbl * tm_ * tn_ * out_itemsize                    # output tile
                + tm_ * tn_ * 4)                                    # f32 accumulator

    # Shrink order: contraction tile first, then rows, then output width (keeps MXU wide).
    while working_set(tm, tn, tk) > vmem_budget:
        if tk > 128:
            tk = _next_smaller_lane_tile(Cp, tk)
        elif tm > 256:
            tm = max(8, (tm // 2) // 8 * 8)
        elif tn > 128:
            tn = _next_smaller_lane_tile(Cp, tn)
        elif tm > 8:
            tm = max(8, (tm // 2) // 8 * 8)
        else:
            break

    grid_m = pl.cdiv(M, tm)
    grid = (grid_m, Cp // tn, Cp // tk)

    flops = 2 * M * Cp * Cp
    bytes_accessed = int(
        mxu_itemsize * ((Cp // tn) * M * Cp            # x slabs re-streamed per j
                        + grid_m * Cp * Cp)            # weight slabs re-streamed per i
        + 4 * (M * Cp + Cp)                            # residual + bias
        + out_itemsize * M * Cp)                       # output

    out = pl.pallas_call(
        res_linear_kernel,
        out_shape=jax.ShapeDtypeStruct((M, Cp), x.dtype),
        grid_spec=pltpu.PrefetchScalarGridSpec(
            num_scalar_prefetch=0,
            grid=grid,
            in_specs=[
                pl.BlockSpec((tm, tk), lambda i, j, k: (i, k)),   # x contraction slab
                pl.BlockSpec((tk, tn), lambda i, j, k: (k, j)),   # wT (in, out) slab
                pl.BlockSpec((1, tn), lambda i, j, k: (0, j)),    # bias slab
                pl.BlockSpec((tm, tn), lambda i, j, k: (i, j)),   # residual (const in k)
            ],
            out_specs=pl.BlockSpec((tm, tn), lambda i, j, k: (i, j)),
            scratch_shapes=[pltpu.VMEM((tm, tn), jnp.float32)],
        ),
        compiler_params=pltpu.CompilerParams(
            # Only the row axis is "parallel": a v7x megacore split then lands on M,
            # giving each TC disjoint x tiles instead of duplicating x-slab HBM traffic.
            dimension_semantics=("parallel", "arbitrary", "arbitrary"),
            vmem_limit_bytes=vmem_limit,
        ),
        cost_estimate=pl.CostEstimate(
            flops=flops, transcendentals=0, bytes_accessed=bytes_accessed),
    )(x_mxu, wT, b2, x2)

    if Cp != C:
        out = out[:, :C]
    return out.reshape(orig_shape)


if __name__ == "__main__":
    key = jax.random.PRNGKey(0)
    k1, k2, k3, k4, k5, k6, k7, k8, k9 = jax.random.split(key, 9)
    HIGH = lax.Precision.HIGHEST

    # --- Case 1: small 2-D input, lane-aligned hidden ---------------------------------
    batch, hidden = 8, 128
    x = jax.random.normal(k1, (batch, hidden), dtype=jnp.float32)
    bound = 1.0 / jnp.sqrt(hidden)
    weight = jax.random.uniform(k2, (hidden, hidden), jnp.float32, -bound, bound)  # (out, in)
    bias = jax.random.uniform(k3, (hidden,), jnp.float32, -bound, bound)

    out = jax.block_until_ready(res_linear(x, weight, bias))
    ref = jnp.dot(x, weight.T, precision=HIGH) + bias + x
    assert jnp.allclose(out, ref, atol=2e-5, rtol=2e-5), "mismatch vs reference (case 1)"

    # --- Case 2: 3-D input with non-128-multiple hidden (exercises padding path) ------
    hidden2 = 96
    x3 = jax.random.normal(k4, (2, 4, hidden2), dtype=jnp.float32)
    bound2 = 1.0 / jnp.sqrt(hidden2)
    weight2 = jax.random.uniform(k5, (hidden2, hidden2), jnp.float32, -bound2, bound2)
    bias2 = jax.random.uniform(k6, (hidden2,), jnp.float32, -bound2, bound2)

    out3 = jax.block_until_ready(res_linear(x3, weight2, bias2))
    ref3 = jnp.einsum("bsc,dc->bsd", x3, weight2, precision=HIGH) + bias2 + x3
    assert jnp.allclose(out3, ref3, atol=2e-5, rtol=2e-5), "mismatch vs reference (case 2)"

    # --- Case 3: force multi-tile j and k axes (exercises accumulator + residual path)
    batch3, hidden3 = 16, 256
    x4 = jax.random.normal(k7, (batch3, hidden3), dtype=jnp.float32)
    bound3 = 1.0 / jnp.sqrt(hidden3)
    weight3 = jax.random.uniform(k8, (hidden3, hidden3), jnp.float32, -bound3, bound3)
    bias3 = jax.random.uniform(k9, (hidden3,), jnp.float32, -bound3, bound3)

    out4 = jax.block_until_ready(
        res_linear(x4, weight3, bias3, target_tn=128, target_tk=128))
    ref4 = jnp.dot(x4, weight3.T, precision=HIGH) + bias3 + x4
    assert jnp.allclose(out4, ref4, atol=2e-5, rtol=2e-5), "mismatch vs reference (case 3)"

    print("KERNEL_OK")
</pallas_src>

<mosaic_0001>
module attributes {stable_mosaic.version = 11 : i64} {
  func.func @res_linear_kernel(%arg0: i32, %arg1: i32, %arg2: i32, %arg3: memref<8x128xf32, #tpu.memory_space<vmem>>, %arg4: memref<128x128xf32, #tpu.memory_space<vmem>>, %arg5: memref<1x128xf32, #tpu.memory_space<vmem>>, %arg6: memref<8x128xf32, #tpu.memory_space<vmem>>, %arg7: memref<8x128xf32, #tpu.memory_space<vmem>>, %arg8: memref<8x128xf32, #tpu.memory_space<vmem>>) attributes {dimension_semantics = [#tpu.dimension_semantics<parallel>, #tpu.dimension_semantics<arbitrary>, #tpu.dimension_semantics<arbitrary>], iteration_bounds = array<i64: 1, 1, 1>, scalar_prefetch = 0 : i64, scratch_operands = 1 : i64, tpu.core_type = #tpu.core_type<tc>, window_params = [{transform_indices = @transform_0, window_bounds = array<i64: 8, 128>}, {transform_indices = @transform_1, window_bounds = array<i64: 128, 128>}, {transform_indices = @transform_2, window_bounds = array<i64: 1, 128>}, {transform_indices = @transform_3, window_bounds = array<i64: 8, 128>}, {transform_indices = @transform_4, window_bounds = array<i64: 8, 128>}]} {
    %c0_i32 = arith.constant 0 : i32
    %0 = arith.cmpi eq, %arg2, %c0_i32 : i32
    %1 = arith.extui %0 : i1 to i32
    %c0_i32_0 = arith.constant 0 : i32
    %2 = arith.cmpi ne, %1, %c0_i32_0 : i32
    scf.if %2 {
      %cst_10 = arith.constant 0.000000e+00 : f32
      %12 = vector.broadcast %cst_10 : f32 to vector<8x128xf32>
      %c0_11 = arith.constant 0 : index
      %c0_12 = arith.constant 0 : index
      %13 = vector.load %arg8[%c0_11, %c0_12] : memref<8x128xf32, #tpu.memory_space<vmem>>, vector<8x128xf32>
      tpu.vector_store %arg8[%c0_11, %c0_12], %12 {strides = array<i32>} : memref<8x128xf32, #tpu.memory_space<vmem>>, vector<8x128xf32>,
    } else {
    }
    %c0 = arith.constant 0 : index
    %c0_1 = arith.constant 0 : index
    %3 = vector.load %arg8[%c0, %c0_1] : memref<8x128xf32, #tpu.memory_space<vmem>>, vector<8x128xf32>
    %c0_2 = arith.constant 0 : index
    %c0_3 = arith.constant 0 : index
    %4 = vector.load %arg3[%c0_2, %c0_3] : memref<8x128xf32, #tpu.memory_space<vmem>>, vector<8x128xf32>
    %c0_4 = arith.constant 0 : index
    %c0_5 = arith.constant 0 : index
    %5 = vector.load %arg4[%c0_4, %c0_5] : memref<128x128xf32, #tpu.memory_space<vmem>>, vector<128x128xf32>
    %cst = arith.constant dense<0.000000e+00> : vector<8x128xf32>
    %6 = tpu.matmul %4, %5, %cst {dimension_numbers = #tpu.dot_dimension_numbers<[1], [0], [0], [1], [0, 0, 1, 1], [], []>} : vector<8x128xf32>, vector<128x128xf32>, vector<8x128xf32> -> vector<8x128xf32>
    %7 = arith.addf %3, %6 : vector<8x128xf32>
    %c0_6 = arith.constant 0 : index
    %c0_7 = arith.constant 0 : index
    %8 = vector.load %arg8[%c0_6, %c0_7] : memref<8x128xf32, #tpu.memory_space<vmem>>, vector<8x128xf32>
    tpu.vector_store %arg8[%c0_6, %c0_7], %7 {strides = array<i32>} : memref<8x128xf32, #tpu.memory_space<vmem>>, vector<8x128xf32>,
    %c0_i32_8 = arith.constant 0 : i32
    %9 = arith.cmpi eq, %arg2, %c0_i32_8 : i32
    %10 = arith.extui %9 : i1 to i32
    %c0_i32_9 = arith.constant 0 : i32
    %11 = arith.cmpi ne, %10, %c0_i32_9 : i32
    scf.if %11 {
      %c0_10 = arith.constant 0 : index
      %c0_11 = arith.constant 0 : index
      %12 = vector.load %arg8[%c0_10, %c0_11] : memref<8x128xf32, #tpu.memory_space<vmem>>, vector<8x128xf32>
      %c0_12 = arith.constant 0 : index
      %c0_13 = arith.constant 0 : index
      %13 = vector.load %arg5[%c0_12, %c0_13] : memref<1x128xf32, #tpu.memory_space<vmem>>, vector<1x128xf32>
      %14 = vector.broadcast %13 : vector<1x128xf32> to vector<8x128xf32>
      %15 = arith.addf %12, %14 : vector<8x128xf32>
      %c0_14 = arith.constant 0 : index
      %c0_15 = arith.constant 0 : index
      %16 = vector.load %arg6[%c0_14, %c0_15] : memref<8x128xf32, #tpu.memory_space<vmem>>, vector<8x128xf32>
      %17 = arith.addf %15, %16 : vector<8x128xf32>
      %c0_16 = arith.constant 0 : index
      %c0_17 = arith.constant 0 : index
      %18 = vector.load %arg7[%c0_16, %c0_17] : memref<8x128xf32, #tpu.memory_space<vmem>>, vector<8x128xf32>
      tpu.vector_store %arg7[%c0_16, %c0_17], %17 {strides = array<i32>} : memref<8x128xf32, #tpu.memory_space<vmem>>, vector<8x128xf32>,
    } else {
    }
    return
  }
  func.func @transform_0(%arg0: i32, %arg1: i32, %arg2: i32) -> (i32, i32) {
    %c0_i32 = arith.constant 0 : i32
    return %arg0, %arg2 : i32, i32
  }
  func.func @transform_1(%arg0: i32, %arg1: i32, %arg2: i32) -> (i32, i32) {
    %c0_i32 = arith.constant 0 : i32
    return %arg2, %arg1 : i32, i32
  }
  func.func @transform_2(%arg0: i32, %arg1: i32, %arg2: i32) -> (i32, i32) {
    %c0_i32 = arith.constant 0 : i32
    %c0_i32_0 = arith.constant 0 : i32
    return %c0_i32, %arg1 : i32, i32
  }
  func.func @transform_3(%arg0: i32, %arg1: i32, %arg2: i32) -> (i32, i32) {
    %c0_i32 = arith.constant 0 : i32
    return %arg0, %arg1 : i32, i32
  }
  func.func @transform_4(%arg0: i32, %arg1: i32, %arg2: i32) -> (i32, i32) {
    %c0_i32 = arith.constant 0 : i32
    return %arg0, %arg1 : i32, i32
  }
}

</mosaic_0001>

<llo_original>
// kernel: tpu_custom_call.1
$region0: #{tpu_custom_call.1}
  #allocation0 [shape = 'u32[]', space=smem, size = 0x4, offset = 0x4, fixed_abs, tag = 'smem constant byte address 0x4 - core index']
  #allocation1 [shape = 'u32[144,128]{1,0:T(1,128)}', space=vmem, size = 0x12000, scoped, tag = 'internal scratch']
  #allocation2 [shape = 'f32[8,128]{1,0:T(8,128)}', space=vmem, size = 0x1000, scoped, tag = 'scratch operand']
  %s0 = inlined_call_operand.hbm [shape: f32[8,128], index: 0, kind: input, shape index: {}]
  %s1 = inlined_call_operand.hbm [shape: f32[128,128], index: 1, kind: input, shape index: {}]
  %s2 = inlined_call_operand.vmem [shape: f32[1,128], index: 2, kind: input, shape index: {}]
  %s3 = inlined_call_operand.vmem [shape: f32[8,128], index: 3, kind: input, shape index: {}]
  %s4 = inlined_call_operand.hbm [shape: f32[8,128], index: 4, kind: output, shape index: {}]
  %s5 = sld [smem:[#allocation0]]
  $region42: #{tpu_custom_call.1} parent=0
    _
  %s7 = ssub.s32 1, %s5
  %s8 = scalar_select 0, %s7, %s5
  $region1: #{tpu_custom_call.1} parent=0
    #allocation3 [shape = 'u8[4096]{0}', space=vmem, size = 0x1000, scoped, tag = 'input window, operand 0, single buffered']
    #allocation4 [shape = 's32[1]{0}', space=sflag, size = 0x4, scoped, tag = 'scoped memory for tpu_custom_call.1']
    #allocation5 [shape = 's32[1]{0}', space=sflag, size = 0x4, scoped, tag = 'scoped memory for tpu_custom_call.1']
    #allocation6 [shape = 'u8[65536]{0}', space=vmem, size = 0x10000, scoped, tag = 'input window, operand 1, single buffered']
    #allocation7 [shape = 's32[1]{0}', space=sflag, size = 0x4, scoped, tag = 'scoped memory for tpu_custom_call.1']
    #allocation8 [shape = 'u8[4096]{0}', space=vmem, size = 0x1000, scoped, tag = 'output window, operand 0, single buffered']
    %9 = vsyncpa [#allocation4], 0
    %10 = vsyncpa [#allocation7], 0
    %11 = vsyncpa [#allocation5], 0
    // Predicated region
    $region2: #{tpu_custom_call.1} parent=1 // pred_check
      _
    $region3: #{tpu_custom_call.1} parent=1 // pred_check_branch
      %13 = sbr.rel (0) target = $region5
    $region4: #{tpu_custom_call.1} parent=1 // pred_region
      %s15 = ssub.s32 128, 128
      %16 = vsyncadd [#allocation4], %s15
      %s18 = sshll.u32 [#allocation3], 4
      %s19 = int_to_ptr.vmem [resolvable:$true] %s18
      %21 = dma.hbm_to_vmem [thread:$0]  %s0, 128, %s19, [#allocation4]
    $region5: #{tpu_custom_call.1} parent=1 // pred_fallthru
      _
    // Predicated region
    $region6: #{tpu_custom_call.1} parent=1 // pred_check
      _
    $region7: #{tpu_custom_call.1} parent=1 // pred_check_branch
      %23 = sbr.rel (0) target = $region9
    $region8: #{tpu_custom_call.1} parent=1 // pred_region
      %s25 = ssub.s32 2048, 2048
      %26 = vsyncadd [#allocation7], %s25
      %s27 = sshll.u32 [#allocation6], 4
      %s28 = int_to_ptr.vmem [resolvable:$true] %s27
      %33 = dma.hbm_to_vmem [thread:$0]  %s1, 2048, %s28, [#allocation7], 128, 128, 8
    $region9: #{tpu_custom_call.1} parent=1 // pred_fallthru
      _
    // Predicated region
    $region10: #{tpu_custom_call.1} parent=1 // pred_check
      _
    $region11: #{tpu_custom_call.1} parent=1 // pred_check_branch
      %35 = sbr.rel (0) target = $region13
    $region12: #{tpu_custom_call.1} parent=1 // pred_region
      _
    $region13: #{tpu_custom_call.1} parent=1 // pred_fallthru
      _
    // Predicated region
    $region14: #{tpu_custom_call.1} parent=1 // pred_check
      _
    $region15: #{tpu_custom_call.1} parent=1 // pred_check_branch
      %37 = sbr.rel (0) target = $region17
    $region16: #{tpu_custom_call.1} parent=1 // pred_region
      _
    $region17: #{tpu_custom_call.1} parent=1 // pred_fallthru
      _
    // Predicated region
    $region18: #{tpu_custom_call.1} parent=1 // pred_check
      _
    $region19: #{tpu_custom_call.1} parent=1 // pred_check_branch
      %39 = sbr.rel (0) target = $region21
    $region20: #{tpu_custom_call.1} parent=1 // pred_region
      %40 = dma.done [#allocation4], 128
    $region21: #{tpu_custom_call.1} parent=1 // pred_fallthru
      _
    // Predicated region
    $region22: #{tpu_custom_call.1} parent=1 // pred_check
      _
    $region23: #{tpu_custom_call.1} parent=1 // pred_check_branch
      %42 = sbr.rel (0) target = $region25
    $region24: #{tpu_custom_call.1} parent=1 // pred_region
      %43 = dma.done [#allocation7], 2048
    $region25: #{tpu_custom_call.1} parent=1 // pred_fallthru
      _
    %p44 = scmp.eq.s32.totalorder 0, 0
    // Predicated region
    $region26: #{tpu_custom_call.1} parent=1 // pred_check
      %p45 = pneg %p44
    $region27: #{tpu_custom_call.1} parent=1 // pred_check_branch
      %47 = sbr.rel (%p45) target = $region29
    $region28: #{tpu_custom_call.1} parent=1 // pred_region
      %48 = vst [vmem:[#allocation2] sm:$0xff] 0.0
    $region29: #{tpu_custom_call.1} parent=1 // pred_fallthru
      _
    %v49 = vld [vmem:[#allocation2] sm:$0xff]
    %v50 = vld [vmem:[#allocation3] sm:$0xff]
    %v51 = vld [vmem:[#allocation6] sm:$0xff]
    %v52 = vld [vmem:[#allocation6 + $0x8] sm:$0xff]
    %v53 = vld [vmem:[#allocation6 + $0x10] sm:$0xff]
    %v54 = vld [vmem:[#allocation6 + $0x18] sm:$0xff]
    %v55 = vld [vmem:[#allocation6 + $0x20] sm:$0xff]
    %v56 = vld [vmem:[#allocation6 + $0x28] sm:$0xff]
    %v57 = vld [vmem:[#allocation6 + $0x30] sm:$0xff]
    %v58 = vld [vmem:[#allocation6 + $0x38] sm:$0xff]
    %v59 = vld [vmem:[#allocation6 + $0x40] sm:$0xff]
    %v60 = vld [vmem:[#allocation6 + $0x48] sm:$0xff]
    %v61 = vld [vmem:[#allocation6 + $0x50] sm:$0xff]
    %v62 = vld [vmem:[#allocation6 + $0x58] sm:$0xff]
    %v63 = vld [vmem:[#allocation6 + $0x60] sm:$0xff]
    %v64 = vld [vmem:[#allocation6 + $0x68] sm:$0xff]
    %v65 = vld [vmem:[#allocation6 + $0x70] sm:$0xff]
    %v66 = vld [vmem:[#allocation6 + $0x78] sm:$0xff]
    %67 = vmatprep.subr.mxu0 0.0
    %68 = vmatpush1.msra.mxu0 %v51
    %69 = vmatprep.subr.mxu0 0.0
    %70 = vmatpush1.msra.mxu0 %v52
    %71 = vmatprep.subr.mxu0 0.0
    %72 = vmatpush1.msra.mxu0 %v53
    %73 = vmatprep.subr.mxu0 0.0
    %74 = vmatpush1.msra.mxu0 %v54
    %75 = vmatprep.subr.mxu0 0.0
    %76 = vmatpush1.msra.mxu0 %v55
    %77 = vmatprep.subr.mxu0 0.0
    %78 = vmatpush1.msra.mxu0 %v56
    %79 = vmatprep.subr.mxu0 0.0
    %80 = vmatpush1.msra.mxu0 %v57
    %81 = vmatprep.subr.mxu0 0.0
    %82 = vmatpush1.msra.mxu0 %v58
    %83 = vmatprep.subr.mxu0 0.0
    %84 = vmatpush1.msra.mxu0 %v59
    %85 = vmatprep.subr.mxu0 0.0
    %86 = vmatpush1.msra.mxu0 %v60
    %87 = vmatprep.subr.mxu0 0.0
    %88 = vmatpush1.msra.mxu0 %v61
    %89 = vmatprep.subr.mxu0 0.0
    %90 = vmatpush1.msra.mxu0 %v62
    %91 = vmatprep.subr.mxu0 0.0
    %92 = vmatpush1.msra.mxu0 %v63
    %93 = vmatprep.subr.mxu0 0.0
    %94 = vmatpush1.msra.mxu0 %v64
    %95 = vmatprep.subr.mxu0 0.0
    %96 = vmatpush1.msra.mxu0 %v65
    %97 = vmatprep.subr.mxu0 0.0
    %98 = vmatpush1.msra.mxu0 %v66
    %99 = vmatprep.subr.mxu0 0.0
    %100 = vmatpush1.msra.mxu0 0.0
    %101 = vmatprep.subr.mxu0 0.0
    %102 = vmatpush1.msra.mxu0 0.0
    %103 = vmatprep.subr.mxu0 0.0
    %104 = vmatpush1.msra.mxu0 0.0
    %105 = vmatprep.subr.mxu0 0.0
    %106 = vmatpush1.msra.mxu0 0.0
    %107 = vmatprep.subr.mxu0 0.0
    %108 = vmatpush1.msra.mxu0 0.0
    %109 = vmatprep.subr.mxu0 0.0
    %110 = vmatpush1.msra.mxu0 0.0
    %111 = vmatprep.subr.mxu0 0.0
    %112 = vmatpush1.msra.mxu0 0.0
    %113 = vmatprep.subr.mxu0 0.0
    %114 = vmatpush1.msra.mxu0 0.0
    %115 = vmatprep.subr.mxu0 0.0
    %116 = vmatpush1.msra.mxu0 0.0
    %117 = vmatprep.subr.mxu0 0.0
    %118 = vmatpush1.msra.mxu0 0.0
    %119 = vmatprep.subr.mxu0 0.0
    %120 = vmatpush1.msra.mxu0 0.0
    %121 = vmatprep.subr.mxu0 0.0
    %122 = vmatpush1.msra.mxu0 0.0
    %123 = vmatprep.subr.mxu0 0.0
    %124 = vmatpush1.msra.mxu0 0.0
    %125 = vmatprep.subr.mxu0 0.0
    %126 = vmatpush1.msra.mxu0 0.0
    %127 = vmatprep.subr.mxu0 0.0
    %128 = vmatpush1.msra.mxu0 0.0
    %129 = vmatprep.subr.mxu0 0.0
    %130 = vmatpush1.msra.mxu0 0.0
    %131 = vmatprep.mubr.f32.mxu0 0.0
    %132 = vmatmul.mubr.f32.gmra.mrb[0].mxu0 %v50
    %v133 = vpop.f32.mrb[0].mxu0
    %v134 = vadd.f32 0.0, %v133
    %v135 = vpop.f32.mrb[0].mxu0
    %136 = vdwg.mxu0
    %v137 = vadd.f32 %v49, %v134
    %138 = vst [vmem:[#allocation2] sm:$0xff] %v137
    // Predicated region
    $region30: #{tpu_custom_call.1} parent=1 // pred_check
      %p139 = pneg %p44
    $region31: #{tpu_custom_call.1} parent=1 // pred_check_branch
      %141 = sbr.rel (%p139) target = $region33
    $region32: #{tpu_custom_call.1} parent=1 // pred_region
      %v142 = vld [vmem:[#allocation2] sm:$0xff]
      %v143 = vld [vmem:[%s2] sm:$0x1]
      %v145 = vlaneseq
      %v146 = vshrl.u32 %v145, 7
      %v147 = vsub.s32 0, %v146
      %v148 = vrot.slane %v143, %v147
      %v150 = vadd.f32 %v142, %v148
      %v151 = vld [vmem:[%s3] sm:$0xff]
      %v152 = vadd.f32 %v150, %v151
      %153 = vst [vmem:[#allocation8] sm:$0xff] %v152
    $region33: #{tpu_custom_call.1} parent=1 // pred_fallthru
      _
    // Predicated region
    $region34: #{tpu_custom_call.1} parent=1 // pred_check
      _
    $region35: #{tpu_custom_call.1} parent=1 // pred_check_branch
      %155 = sbr.rel (0) target = $region37
    $region36: #{tpu_custom_call.1} parent=1 // pred_region
      %s157 = ssub.s32 128, 128
      %158 = vsyncadd [#allocation5], %s157
      %s160 = sshll.u32 [#allocation8], 4
      %s161 = int_to_ptr.vmem [resolvable:$true] %s160
      %163 = dma.vmem_to_hbm [thread:$0]  %s161, 128, %s4, [#allocation5]
    $region37: #{tpu_custom_call.1} parent=1 // pred_fallthru
      _
    // Predicated region
    $region38: #{tpu_custom_call.1} parent=1 // pred_check
      _
    $region39: #{tpu_custom_call.1} parent=1 // pred_check_branch
      %165 = sbr.rel (0) target = $region41
    $region40: #{tpu_custom_call.1} parent=1 // pred_region
      %166 = dma.done [#allocation5], 128
    $region41: #{tpu_custom_call.1} parent=1 // pred_fallthru
      _
    %167 = vsyncpa [#allocation4], 1
    %168 = vsyncpa [#allocation7], 1
    %169 = vsyncpa [#allocation5], 1

</llo_original>
